<compile_context>
chip_gen: v7x
topology: tpu7x:2x2x1
jax: 0.10.0
libtpu: 0.0.40
codegen_flags: <defaults>
</compile_context>

<pallas_src>
import jax
import jax.numpy as jnp
from jax.experimental import pallas as pl
from jax.experimental.pallas import tpu as pltpu


def _fused_avgpool_kernel(x_ref, c_ref, o_ref):
    """One (R, s*W) @ (s*W, Wo) matmul == s x s average pool of R output rows.

    x_ref: (R, s*W)  -- each row holds the s consecutive input image rows
                        feeding one output row (contiguous NCHW data).
    c_ref: (s*W, Wo) -- pooling matrix, carries the full 1/s^2 scale.
    o_ref: (R, Wo)
    """
    x = x_ref[...].astype(c_ref.dtype)
    out = jnp.dot(x, c_ref[...], preferred_element_type=jnp.float32)
    o_ref[...] = out.astype(o_ref.dtype)


def _vmem_capacity_bytes(default=64 * 1024 * 1024):
    """Physical VMEM per TensorCore; conservative 64 MiB (v7x) if unknown."""
    try:
        info = pltpu.get_tpu_info()
    except Exception:
        return default
    for name in ("vmem_capacity_bytes", "vmem_bytes", "vmem_size_bytes"):
        val = getattr(info, name, None)
        if val:
            try:
                return int(val)
            except (TypeError, ValueError):
                pass
    return default


def _choose_row_chunk(m_rows, per_row_bytes, budget_bytes):
    """Largest row chunk R (multiple of 8, dividing m_rows) whose per-block
    VMEM footprint fits the budget; prefers an even grid-step count (v7x
    megacore split), then >= 2 steps (DMA/compute pipelining)."""
    max_r = (budget_bytes // max(per_row_bytes, 1)) // 8 * 8
    cands = [r for r in range(8, min(m_rows, max_r) + 1, 8) if m_rows % r == 0]
    if not cands:
        # No multiple-of-8 divisor fits the budget: fall back to the whole
        # array as a single block (always layout-legal).
        return m_rows
    even = [r for r in cands if (m_rows // r) % 2 == 0]
    multi = [r for r in cands if (m_rows // r) >= 2]
    if even:
        return max(even)
    if multi:
        return max(multi)
    return max(cands)


def fused_avg_pool2d(x, num_pools):
    """num_pools successive AvgPool2d(2, 2) on an NCHW tensor, fused into a
    single Pallas kernel (one 2^k x 2^k / stride-2^k average pool with
    PyTorch floor semantics for odd spatial dims)."""
    if num_pools <= 0:
        return x
    N, C, H, W = x.shape
    s = 2 ** num_pools
    Ho, Wo = H // s, W // s
    if Ho < 1 or Wo < 1:
        raise ValueError(
            f"input spatial dims ({H}, {W}) too small for {num_pools} "
            f"AvgPool2d(2, 2) layers")
    # PyTorch AvgPool2d(2,2) floors odd dims at every layer; that is exactly
    # equivalent to cropping the input to (Ho*s, Wo*s) once up front.
    if H != Ho * s or W != Wo * s:
        x = x[:, :, : Ho * s, : Wo * s]
    Wc = Wo * s

    M = N * C * Ho            # one slab row per output row
    sW = s * Wc               # K dimension of the fused matmul
    # Free (contiguous) reshape: row m = (plane, out-row); cols = s input rows.
    x2 = x.reshape(M, sW)

    # MXU operand dtype: bf16 operands for bf16 inputs (f32 accumulation),
    # f32 otherwise.  1/s^2 is exact in bf16 since s is a power of two.
    compute_dtype = jnp.bfloat16 if x.dtype == jnp.bfloat16 else jnp.float32
    inv = 1.0 / float(s * s)
    # (Wc, Wo) block: row w -> column w // s; tiled over the s row offsets.
    c_block = jnp.repeat(jnp.eye(Wo, dtype=jnp.float32), s, axis=0)   # (Wc, Wo)
    c_mat = (inv * jnp.tile(c_block, (s, 1))).astype(compute_dtype)   # (sW, Wo)

    itemsize = jnp.dtype(x.dtype).itemsize
    # Per-row VMEM cost: double-buffered input + output, plus f32 matmul acc.
    per_row_bytes = 2 * sW * itemsize + 2 * Wo * itemsize + Wo * 4

    vmem_cap = _vmem_capacity_bytes()
    if vmem_cap >= 128 * 1024 * 1024:        # v5e / v6e: 128 MiB VMEM
        block_budget = 12 * 1024 * 1024
        vmem_limit = 64 * 1024 * 1024
    else:                                     # v7x: 64 MiB per TensorCore
        block_budget = 8 * 1024 * 1024
        vmem_limit = 44 * 1024 * 1024

    R = _choose_row_chunk(M, per_row_bytes, block_budget)
    grid = (M // R,)

    c_bytes = c_mat.size * jnp.dtype(compute_dtype).itemsize
    needed = R * per_row_bytes + 2 * c_bytes + (1 << 20)
    vmem_limit = max(vmem_limit, needed)
    vmem_limit = min(vmem_limit, max(vmem_cap - (8 << 20), needed))

    out2 = pl.pallas_call(
        _fused_avgpool_kernel,
        out_shape=jax.ShapeDtypeStruct((M, Wo), x.dtype),
        grid_spec=pltpu.PrefetchScalarGridSpec(
            num_scalar_prefetch=0,
            grid=grid,
            in_specs=[
                pl.BlockSpec((R, sW), lambda i: (i, 0)),
                pl.BlockSpec((sW, Wo), lambda i: (0, 0)),
            ],
            out_specs=pl.BlockSpec((R, Wo), lambda i: (i, 0)),
        ),
        compiler_params=pltpu.CompilerParams(
            dimension_semantics=("parallel",),
            vmem_limit_bytes=int(vmem_limit),
        ),
    )(x2, c_mat)
    return out2.reshape(N, C, Ho, Wo)


class MaskLayers:
    """JAX/Pallas port of Mask_layers(vgg, method='simple').

    The original module holds no learnable parameters: for method='simple' it
    keeps one AvgPool2d(2, 2) per pooling layer found in the VGG.  `num_pools`
    stands in for the number of pooling layers discovered while iterating
    vgg.named_children().  Any other method leaves the Sequential empty
    (identity forward).
    """

    def __init__(self, num_pools=2, method="simple"):
        self.method = method
        self.num_pools = num_pools if method == "simple" else 0

    def __call__(self, x):
        # k successive AvgPool2d(2, 2) == one 2^k x 2^k average pool; run the
        # whole pooling stack as a single fused Pallas kernel.
        return fused_avg_pool2d(x, self.num_pools)


if __name__ == "__main__":
    key = jax.random.PRNGKey(0)
    # Small NCHW input consistent with the module (VGG-style image tensor).
    x = jax.random.normal(key, (2, 4, 16, 16), dtype=jnp.float32)

    model = MaskLayers(num_pools=2, method="simple")   # 16 -> 8 -> 4 spatial
    y = jax.block_until_ready(model(x))

    # Pure-JAX reference: successive 2x2 average pools (PyTorch semantics).
    ref = x
    for _ in range(model.num_pools):
        n, c, h, w = ref.shape
        ref = ref[:, :, : (h // 2) * 2, : (w // 2) * 2]
        ref = ref.reshape(n, c, h // 2, 2, w // 2, 2).mean(axis=(3, 5))

    assert y.shape == (2, 4, 4, 4), y.shape
    assert jnp.allclose(y, ref, atol=1e-5, rtol=1e-5), "mismatch vs reference"
    print("KERNEL_OK")
</pallas_src>

<mosaic_0001>
module attributes {stable_mosaic.version = 11 : i64} {
  func.func @_fused_avgpool_kernel(%arg0: i32, %arg1: memref<16x64xf32, #tpu.memory_space<vmem>>, %arg2: memref<64x4xf32, #tpu.memory_space<vmem>>, %arg3: memref<16x4xf32, #tpu.memory_space<vmem>>) attributes {dimension_semantics = [#tpu.dimension_semantics<parallel>], iteration_bounds = array<i64: 2>, scalar_prefetch = 0 : i64, scratch_operands = 0 : i64, tpu.core_type = #tpu.core_type<tc>, window_params = [{transform_indices = @transform_0, window_bounds = array<i64: 16, 64>}, {pipeline_mode = #tpu.pipeline_mode<synchronous>, transform_indices = @transform_1, window_bounds = array<i64: 64, 4>}, {transform_indices = @transform_2, window_bounds = array<i64: 16, 4>}]} {
    %c0 = arith.constant 0 : index
    %c0_0 = arith.constant 0 : index
    %0 = vector.load %arg1[%c0, %c0_0] : memref<16x64xf32, #tpu.memory_space<vmem>>, vector<16x64xf32>
    %c0_1 = arith.constant 0 : index
    %c0_2 = arith.constant 0 : index
    %1 = vector.load %arg2[%c0_1, %c0_2] : memref<64x4xf32, #tpu.memory_space<vmem>>, vector<64x4xf32>
    %cst = arith.constant dense<0.000000e+00> : vector<16x4xf32>
    %2 = tpu.matmul %0, %1, %cst {dimension_numbers = #tpu.dot_dimension_numbers<[1], [0], [0], [1], [0, 0, 1, 1], [], []>} : vector<16x64xf32>, vector<64x4xf32>, vector<16x4xf32> -> vector<16x4xf32>
    %c0_3 = arith.constant 0 : index
    %c0_4 = arith.constant 0 : index
    %3 = vector.load %arg3[%c0_3, %c0_4] : memref<16x4xf32, #tpu.memory_space<vmem>>, vector<16x4xf32>
    tpu.vector_store %arg3[%c0_3, %c0_4], %2 {strides = array<i32>} : memref<16x4xf32, #tpu.memory_space<vmem>>, vector<16x4xf32>,
    return
  }
  func.func @transform_0(%arg0: i32) -> (i32, i32) {
    %c0_i32 = arith.constant 0 : i32
    %c0_i32_0 = arith.constant 0 : i32
    return %arg0, %c0_i32 : i32, i32
  }
  func.func @transform_1(%arg0: i32) -> (i32, i32) {
    %c0_i32 = arith.constant 0 : i32
    %c0_i32_0 = arith.constant 0 : i32
    %c0_i32_1 = arith.constant 0 : i32
    return %c0_i32, %c0_i32_0 : i32, i32
  }
  func.func @transform_2(%arg0: i32) -> (i32, i32) {
    %c0_i32 = arith.constant 0 : i32
    %c0_i32_0 = arith.constant 0 : i32
    return %arg0, %c0_i32 : i32, i32
  }
}

</mosaic_0001>

<llo_original>
// kernel: tpu_custom_call.1
$region0: #{tpu_custom_call.1}
  #allocation0 [shape = 'u32[]', space=smem, size = 0x4, offset = 0x4, fixed_abs, tag = 'smem constant byte address 0x4 - core index']
  #allocation1 [shape = 'u32[144,128]{1,0:T(1,128)}', space=vmem, size = 0x12000, scoped, tag = 'internal scratch']
  %s0 = inlined_call_operand.vmem [shape: f32[32,64], index: 0, kind: input, shape index: {}]
  %s1 = inlined_call_operand.vmem [shape: f32[64,4], index: 1, kind: input, shape index: {}]
  %s2 = inlined_call_operand.vmem [shape: f32[32,4], index: 2, kind: output, shape index: {}]
  %s3 = sld [smem:[#allocation0]]
  $region41: #{tpu_custom_call.1} parent=0
    _
  %s5 = ssub.s32 1, %s3
  %s6 = scalar_select 0, %s5, %s3
  loop: start=0, step=1, limit=4
  $region2: #{tpu_custom_call.1} parent=0 // loop_pre_header
    _
  $region3: #{tpu_custom_call.1} parent=0 // loop_header
    %s8 = sphi 0, %s12
    %p9 = scmp.ge.s32.totalorder %s8, 4
    %s18 = sphi 0, %s20
    %s21 = sphi 0, %s18
    %s22 = sphi 0, %s21
    %s38 = sphi 0, %s22
    %s42 = sphi 0, %s42
    %s44 = sphi 0, %s42
    %s45 = sphi 0, %s44
    %s59 = sphi 0, %s45
    %s65 = sphi 0, %s67
    %s68 = sphi 0, %s65
    %s69 = sphi 0, %s68
    %s85 = sphi 0, %s69
  $region4: #{tpu_custom_call.1} parent=0 // loop_header_branch
    %11 = sbr.rel (%p9) target = $region8
  $region5: #{tpu_custom_call.1} parent=0 // loop_body
    %s13 = ssub.s32 %s8, 1
    %s14 = ssub.s32 %s8, 2
    %s15 = sadd.s32 %s8, 1
    %s16 = ssub.s32 %s8, %s15
    %p17 = scmp.eq.s32.totalorder %s16, 0
    %s19 = sadd.s32 %s18, 1
    %s20 = scalar_select %p17, %s18, %s19
    %p23 = pneg %p17
    %p24 = scmp.eq.s32.totalorder %s8, 1
    %p25 = por %p23, %p24
    %p26 = scmp.ne.s32.totalorder %s18, %s21
    %p27 = scmp.eq.s32.totalorder %s8, 0
    %p28 = por %p26, %p27
    %p29 = scmp.ne.s32.totalorder %s18, %s21
    %p30 = scmp.eq.s32.totalorder %s13, 1
    %p31 = por %p29, %p30
    %p32 = scmp.ne.s32.totalorder %s21, %s22
    %p33 = scmp.eq.s32.totalorder %s13, 0
    %p34 = por %p32, %p33
    %p35 = scmp.ne.s32.totalorder %s21, %s22
    %p36 = scmp.eq.s32.totalorder %s14, 1
    %p37 = por %p35, %p36
    %p39 = scmp.ne.s32.totalorder %s22, %s38
    %p40 = scmp.eq.s32.totalorder %s14, 0
    %p41 = por %p39, %p40
    %s43 = sadd.s32 %s42, 1
    %p46 = scmp.eq.s32.totalorder %s8, 1
    %p47 = scmp.ne.s32.totalorder %s42, %s44
    %p48 = scmp.eq.s32.totalorder %s8, 0
    %p49 = por %p47, %p48
    %p50 = scmp.ne.s32.totalorder %s42, %s44
    %p51 = scmp.eq.s32.totalorder %s13, 1
    %p52 = por %p50, %p51
    %p53 = scmp.ne.s32.totalorder %s44, %s45
    %p54 = scmp.eq.s32.totalorder %s13, 0
    %p55 = por %p53, %p54
    %p56 = scmp.ne.s32.totalorder %s44, %s45
    %p57 = scmp.eq.s32.totalorder %s14, 1
    %p58 = por %p56, %p57
    %p60 = scmp.ne.s32.totalorder %s45, %s59
    %p61 = scmp.eq.s32.totalorder %s14, 0
    %p62 = por %p60, %p61
    %s63 = ssub.s32 %s8, %s15
    %p64 = scmp.eq.s32.totalorder %s63, 0
    %s66 = sadd.s32 %s65, 1
    %s67 = scalar_select %p64, %s65, %s66
    %p70 = pneg %p64
    %p71 = scmp.eq.s32.totalorder %s8, 1
    %p72 = por %p70, %p71
    %p73 = scmp.ne.s32.totalorder %s65, %s68
    %p74 = scmp.eq.s32.totalorder %s8, 0
    %p75 = por %p73, %p74
    %p76 = scmp.ne.s32.totalorder %s65, %s68
    %p77 = scmp.eq.s32.totalorder %s13, 1
    %p78 = por %p76, %p77
    %p79 = scmp.ne.s32.totalorder %s68, %s69
    %p80 = scmp.eq.s32.totalorder %s13, 0
    %p81 = por %p79, %p80
    %p82 = scmp.ne.s32.totalorder %s68, %s69
    %p83 = scmp.eq.s32.totalorder %s14, 1
    %p84 = por %p82, %p83
    %p86 = scmp.ne.s32.totalorder %s69, %s85
    %p87 = scmp.eq.s32.totalorder %s14, 0
    %p88 = por %p86, %p87
    %p89 = scmp.le.s32.totalorder 1, %s8
    %p90 = scmp.lt.s32.totalorder %s8, 3
    %p91 = pnand %p89, %p90
    %p92 = pneg %p91
    // Predicated region
    $region9: #{tpu_custom_call.1} parent=5 // pred_check
      _
    $region10: #{tpu_custom_call.1} parent=5 // pred_check_branch
      %94 = sbr.rel (%p91) target = $region12
    $region11: #{tpu_custom_call.1} parent=5 // pred_region
      %s95 = ssub.s32 %s8, 1
      // Predicated region
      $region13: #{tpu_custom_call.1} parent=11 // pred_check
        %p96 = pneg %p55
      $region14: #{tpu_custom_call.1} parent=11 // pred_check_branch
        %98 = sbr.rel (%p96) target = $region16
      $region15: #{tpu_custom_call.1} parent=11 // pred_region
        _
      $region16: #{tpu_custom_call.1} parent=11 // pred_fallthru
        _
    $region12: #{tpu_custom_call.1} parent=5 // pred_fallthru
      _
    %p99 = scmp.lt.s32.totalorder %s8, 2
    // Predicated region
    $region17: #{tpu_custom_call.1} parent=5 // pred_check
      %p100 = pneg %p99
    $region18: #{tpu_custom_call.1} parent=5 // pred_check_branch
      %102 = sbr.rel (%p100) target = $region20
    $region19: #{tpu_custom_call.1} parent=5 // pred_region
      // Predicated region
      $region21: #{tpu_custom_call.1} parent=19 // pred_check
        %p103 = pneg %p28
      $region22: #{tpu_custom_call.1} parent=19 // pred_check_branch
        %105 = sbr.rel (%p103) target = $region24
      $region23: #{tpu_custom_call.1} parent=19 // pred_region
        %s106 = smul.u32 2, %s8
        %p107 = scmp.lt.s32.totalorder %s106, 3
        %s108 = scalar_select %p107, %s106, 3
        %s109 = smul.addr %s108, 8
        %s110 = scalar_lea.vmem %s0, %s109
        %s111 = smul.u32 2, %s8
      $region24: #{tpu_custom_call.1} parent=19 // pred_fallthru
        _
    $region20: #{tpu_custom_call.1} parent=5 // pred_fallthru
      _
    %p112 = scmp.le.s32.totalorder 1, %s8
    %p113 = scmp.lt.s32.totalorder %s8, 3
    %p114 = pnand %p112, %p113
    %p115 = pneg %p114
    // Predicated region
    $region25: #{tpu_custom_call.1} parent=5 // pred_check
      _
    $region26: #{tpu_custom_call.1} parent=5 // pred_check_branch
      %117 = sbr.rel (%p114) target = $region28
    $region27: #{tpu_custom_call.1} parent=5 // pred_region
      %s118 = ssub.s32 %s8, 1
      %s119 = smul.u32 2, %s13
      %p120 = scmp.lt.s32.totalorder %s119, 3
      %s121 = scalar_select %p120, %s119, 3
      %s122 = smul.addr %s121, 8
      %s123 = scalar_lea.vmem %s0, %s122
      %p124 = pneg %p34
      %p125 = pneg %p31
      %p126 = pneg %p55
      %p127 = pneg %p52
      %p128 = pneg %p81
      %p129 = pneg %p78
      %s130 = smul.u32 2, %s13
      %p131 = scmp.lt.s32.totalorder %s130, 3
      %s132 = scalar_select %p131, %s130, 3
      %s133 = smul.addr %s132, 8
      %s134 = scalar_lea.vmem %s2, %s133
      %s135 = smul.u32 2, %s13
      %p136 = scmp.lt.s32.totalorder %s135, 3
      %s137 = scalar_select %p136, %s135, 3
      %s138 = smul.addr %s137, 8
      %s139 = scalar_lea.vmem %s0, %s138
      %s140 = smul.u32 2, %s13
      %s141 = smul.u32 2, %s13
      %p142 = scmp.lt.s32.totalorder %s141, 3
      %s143 = scalar_select %p142, %s141, 3
      %s144 = smul.addr %s143, 8
      %s145 = scalar_lea.vmem %s2, %s144
      %s146 = smul.u32 2, %s13
      %v147 = vld [vmem:[%s139] sm:$0xff]
      %v148 = vld [vmem:[%s139 + $0x8] sm:$0xff]
      %v149 = vld [vmem:[%s1] sm:$0xff]
      %v150 = vld [vmem:[%s1 + $0x8] sm:$0xff]
      %v151 = vld [vmem:[%s1 + $0x10] sm:$0xff]
      %v152 = vld [vmem:[%s1 + $0x18] sm:$0xff]
      %v153 = vld [vmem:[%s1 + $0x20] sm:$0xff]
      %v154 = vld [vmem:[%s1 + $0x28] sm:$0xff]
      %v155 = vld [vmem:[%s1 + $0x30] sm:$0xff]
      %v156 = vld [vmem:[%s1 + $0x38] sm:$0xff]
      %vm157 = vcmask 523264
      %v159 = vsel %vm157, %v147, 0
      %v162 = vsel %vm157, %v148, 0
      %164 = vmatprep.subr.mxu0 0.0
      %165 = vmatpush1.msra.mxu0 %v149
      %166 = vmatprep.subr.mxu0 0.0
      %167 = vmatpush1.msra.mxu0 %v150
      %168 = vmatprep.subr.mxu0 0.0
      %169 = vmatpush1.msra.mxu0 %v151
      %170 = vmatprep.subr.mxu0 0.0
      %171 = vmatpush1.msra.mxu0 %v152
      %172 = vmatprep.subr.mxu0 0.0
      %173 = vmatpush1.msra.mxu0 %v153
      %174 = vmatprep.subr.mxu0 0.0
      %175 = vmatpush1.msra.mxu0 %v154
      %176 = vmatprep.subr.mxu0 0.0
      %177 = vmatpush1.msra.mxu0 %v155
      %178 = vmatprep.subr.mxu0 0.0
      %179 = vmatpush1.msra.mxu0 %v156
      %180 = vmatprep.subr.mxu0 0.0
      %181 = vmatpush1.msra.mxu0 0.0
      %182 = vmatprep.subr.mxu0 0.0
      %183 = vmatpush1.msra.mxu0 0.0
      %184 = vmatprep.subr.mxu0 0.0
      %185 = vmatpush1.msra.mxu0 0.0
      %186 = vmatprep.subr.mxu0 0.0
      %187 = vmatpush1.msra.mxu0 0.0
      %188 = vmatprep.subr.mxu0 0.0
      %189 = vmatpush1.msra.mxu0 0.0
      %190 = vmatprep.subr.mxu0 0.0
      %191 = vmatpush1.msra.mxu0 0.0
      %192 = vmatprep.subr.mxu0 0.0
      %193 = vmatpush1.msra.mxu0 0.0
      %194 = vmatprep.subr.mxu0 0.0
      %195 = vmatpush1.msra.mxu0 0.0
      %196 = vmatprep.subr.mxu0 0.0
      %197 = vmatpush1.msra.mxu0 0.0
      %198 = vmatprep.subr.mxu0 0.0
      %199 = vmatpush1.msra.mxu0 0.0
      %200 = vmatprep.subr.mxu0 0.0
      %201 = vmatpush1.msra.mxu0 0.0
      %202 = vmatprep.subr.mxu0 0.0
      %203 = vmatpush1.msra.mxu0 0.0
      %204 = vmatprep.subr.mxu0 0.0
      %205 = vmatpush1.msra.mxu0 0.0
      %206 = vmatprep.subr.mxu0 0.0
      %207 = vmatpush1.msra.mxu0 0.0
      %208 = vmatprep.subr.mxu0 0.0
      %209 = vmatpush1.msra.mxu0 0.0
      %210 = vmatprep.subr.mxu0 0.0
      %211 = vmatpush1.msra.mxu0 0.0
      %212 = vmatprep.subr.mxu0 0.0
      %213 = vmatpush1.msra.mxu0 0.0
      %214 = vmatprep.subr.mxu0 0.0
      %215 = vmatpush1.msra.mxu0 0.0
      %216 = vmatprep.subr.mxu0 0.0
      %217 = vmatpush1.msra.mxu0 0.0
      %218 = vmatprep.subr.mxu0 0.0
      %219 = vmatpush1.msra.mxu0 0.0
      %220 = vmatprep.subr.mxu0 0.0
      %221 = vmatpush1.msra.mxu0 0.0
      %222 = vmatprep.subr.mxu0 0.0
      %223 = vmatpush1.msra.mxu0 0.0
      %224 = vmatprep.subr.mxu0 0.0
      %225 = vmatpush1.msra.mxu0 0.0
      %226 = vmatprep.subr.mxu0 0.0
      %227 = vmatpush1.msra.mxu0 0.0
      %228 = vmatprep.mubr.f32.mxu0 0.0
      %229 = vmatmul.mubr.f32.gmra.mrb[0].mxu0 %v159
      %v230 = vpop.f32.mrb[0].mxu0
      %v231 = vadd.f32 0.0, %v230
      %v232 = vpop.f32.mrb[0].mxu0
      %233 = vmatprep.mubr.f32.mxu0 0.0
      %234 = vmatmul.mubr.f32.gmra.mrb[0].mxu0 %v162
      %v235 = vpop.f32.mrb[0].mxu0
      %v236 = vadd.f32 0.0, %v235
      %v237 = vpop.f32.mrb[0].mxu0
      %238 = vdwg.mxu0
      %vm239 = vcmask 31744
      %240 = vst.msk [vmem:[%s145] sm:$0xff] %vm239, %v231
      %241 = vst.msk [vmem:[%s145 + $0x8] sm:$0xff] %vm239, %v236
      %s242 = smul.u32 2, %s13
      %p243 = scmp.lt.s32.totalorder %s242, 3
      %s244 = scalar_select %p243, %s242, 3
      %s245 = smul.addr %s244, 8
      %s246 = scalar_lea.vmem %s2, %s245
      // Predicated region
      $region29: #{tpu_custom_call.1} parent=27 // pred_check
        %p247 = pneg %p78
      $region30: #{tpu_custom_call.1} parent=27 // pred_check_branch
        %249 = sbr.rel (%p247) target = $region32
      $region31: #{tpu_custom_call.1} parent=27 // pred_region
        %s250 = smul.u32 2, %s13
      $region32: #{tpu_custom_call.1} parent=27 // pred_fallthru
        _
    $region28: #{tpu_custom_call.1} parent=5 // pred_fallthru
      _
    %p251 = scmp.le.s32.totalorder 2, %s8
    // Predicated region
    $region33: #{tpu_custom_call.1} parent=5 // pred_check
      %p252 = pneg %p251
    $region34: #{tpu_custom_call.1} parent=5 // pred_check_branch
      %254 = sbr.rel (%p252) target = $region36
    $region35: #{tpu_custom_call.1} parent=5 // pred_region
      %s255 = ssub.s32 %s8, 2
      // Predicated region
      $region37: #{tpu_custom_call.1} parent=35 // pred_check
        %p256 = pneg %p84
      $region38: #{tpu_custom_call.1} parent=35 // pred_check_branch
        %258 = sbr.rel (%p256) target = $region40
      $region39: #{tpu_custom_call.1} parent=35 // pred_region
        %s259 = smul.u32 2, %s14
        %p260 = scmp.lt.s32.totalorder %s259, 3
        %s261 = scalar_select %p260, %s259, 3
        %s262 = smul.addr %s261, 8
        %s263 = scalar_lea.vmem %s2, %s262
      $region40: #{tpu_custom_call.1} parent=35 // pred_fallthru
        _
    $region36: #{tpu_custom_call.1} parent=5 // pred_fallthru
      _
  $region6: #{tpu_custom_call.1} parent=0 // loop_footer
    %s12 = sadd.s32 1, %s8
  $region7: #{tpu_custom_call.1} parent=0 // loop_footer_branch
    %7 = sbr.rel target = $region3
  $region8: #{tpu_custom_call.1} parent=0 // loop_exit
    _

</llo_original>
